<compile_context>
chip_gen: v7x
topology: tpu7x:2x2x1
jax: 0.10.0
libtpu: 0.0.40
codegen_flags: <defaults>
</compile_context>

<pallas_src>
import functools

import jax
import jax.numpy as jnp
from jax.experimental import pallas as pl
from jax.experimental.pallas import tpu as pltpu


# --------------------------------------------------------------------------- #
# Kernel body
# --------------------------------------------------------------------------- #
def _ffn_kernel(x_ref, w13_ref, w2_ref, o_ref, acc_ref, *, th):
    # x_ref:   (tm, dim)      compute dtype (bf16)
    # w13_ref: (dim, 2*th)    [w1 tile | w3 tile] for hidden tile k (contiguous slab)
    # w2_ref:  (th, dim)      down-projection tile k (contiguous slab)
    # o_ref:   (tm, dim)      output tile (written on the last hidden step)
    # acc_ref: (tm, dim) f32  accumulator, resident across the hidden axis
    k = pl.program_id(1)

    @pl.when(k == 0)
    def _():
        acc_ref[...] = jnp.zeros_like(acc_ref)

    x = x_ref[...]
    # Fused gate/up projection: one MXU pass producing [h1 | h3] for this tile.
    h = jnp.dot(x, w13_ref[...], preferred_element_type=jnp.float32)  # (tm, 2*th)
    h1 = h[:, :th]
    h3 = h[:, th:]
    g = (h1 * jax.nn.sigmoid(h1)) * h3  # SwiGLU gate, f32

    # Down projection, accumulated over hidden tiles.
    acc_ref[...] += jnp.dot(g.astype(w2_ref.dtype), w2_ref[...],
                            preferred_element_type=jnp.float32)

    @pl.when(k == pl.num_programs(1) - 1)
    def _():
        o_ref[...] = acc_ref[...].astype(o_ref.dtype)


# --------------------------------------------------------------------------- #
# Helpers
# --------------------------------------------------------------------------- #
def _round_up(a, b):
    return (a + b - 1) // b * b


def _tpu_generation():
    try:
        kind = jax.devices()[0].device_kind.lower()
    except Exception:
        return "unknown"
    if "v7" in kind:
        return "v7x"
    if "v6" in kind:
        return "v6e"
    if "v5e" in kind or "v5 lite" in kind or "v5litepod" in kind:
        return "v5e"
    return "unknown"


def _vmem_capacity_bytes(gen):
    try:
        return int(pltpu.get_tpu_info().vmem_capacity_bytes)
    except Exception:
        return (64 << 20) if gen == "v7x" else (128 << 20)


# Per-generation defaults (see perf notes at top of file).
_GEN_DEFAULTS = {
    "v5e": dict(block_tokens=512, weight_bufs=3),
    "v6e": dict(block_tokens=1024, weight_bufs=2),
    "v7x": dict(block_tokens=512, weight_bufs=2),
    "unknown": dict(block_tokens=256, weight_bufs=2),
}


def _pick_hidden_tile(hidden, target):
    """Largest multiple of 128 that divides `hidden` and is <= target (else hidden)."""
    if hidden <= target:
        return hidden
    th = max(128, (target // 128) * 128)
    while th >= 128:
        if hidden % th == 0:
            return th
        th -= 128
    return hidden


def _vmem_footprint(tm, th, dim, weight_bufs, compute_itemsize, out_itemsize):
    """Approximate kernel-resident VMEM bytes (incl. pipelining buffers)."""
    x_bytes = 2 * tm * dim * compute_itemsize                  # double-buffered input
    w13_bytes = weight_bufs * dim * 2 * th * compute_itemsize  # fused weight slab(s)
    w2_bytes = weight_bufs * th * dim * compute_itemsize
    o_bytes = 2 * tm * dim * out_itemsize                      # double-buffered output
    acc_bytes = 4 * tm * dim                                   # f32 accumulator scratch
    inter_bytes = 4 * (tm * 2 * th + tm * th + tm * dim)       # h, g, dot-result temps
    return x_bytes + w13_bytes + w2_bytes + o_bytes + acc_bytes + inter_bytes


# --------------------------------------------------------------------------- #
# Weight preparation (one-time, hoisted out of the per-call path)
# --------------------------------------------------------------------------- #
def prepare_ffn_weights(w1, w2, w3, *, block_hidden=512, compute_dtype=jnp.bfloat16):
    """One-time weight relayout.  Do this at init and cache the result.

    w1, w3: (hidden, dim)   nn.Linear (out_features, in_features) layout
    w2:     (dim, hidden)

    Returns:
      w13: (nk, dim, 2*th)  hidden-tile-major fused [w1 | w3] slabs
      w2t: (nk, th, dim)    hidden-tile-major down-projection slabs
    """
    hidden, dim = w1.shape
    assert w3.shape == (hidden, dim)
    assert w2.shape == (dim, hidden)
    th = _pick_hidden_tile(hidden, block_hidden)
    nk = hidden // th

    w1_t = jnp.transpose(w1).astype(compute_dtype)  # (dim, hidden)
    w3_t = jnp.transpose(w3).astype(compute_dtype)  # (dim, hidden)
    # Hidden-tile-major fused layout: slab k = [w1 tile k | w3 tile k], contiguous.
    w13 = jnp.concatenate(
        [w1_t.reshape(dim, nk, th).transpose(1, 0, 2),
         w3_t.reshape(dim, nk, th).transpose(1, 0, 2)],
        axis=2)                                                   # (nk, dim, 2*th)
    w2t = jnp.transpose(w2).astype(compute_dtype).reshape(nk, th, dim)
    return w13, w2t


# --------------------------------------------------------------------------- #
# Forward pass (hot path) on pre-layouted weights
# --------------------------------------------------------------------------- #
def feed_forward_prepared(x, w13, w2t, *, block_tokens=None, dropout_p=0.0):
    """SwiGLU FFN forward.  x: (..., dim);  w13/w2t from prepare_ffn_weights."""
    # TODO(synk): dropout p > 0 not implemented (config dropout == 0.0 -> identity).
    assert dropout_p == 0.0, "dropout > 0 not implemented in the kernel"

    nk, th, dim = w2t.shape
    assert w13.shape == (nk, dim, 2 * th)
    compute_dtype = w13.dtype

    orig_shape = x.shape
    assert orig_shape[-1] == dim
    x2d = x.reshape(-1, dim)
    tokens = x2d.shape[0]
    out_dtype = x.dtype

    gen = _tpu_generation()
    defaults = _GEN_DEFAULTS.get(gen, _GEN_DEFAULTS["unknown"])
    weight_bufs = defaults["weight_bufs"]
    auto_tokens = block_tokens is None
    if auto_tokens:
        block_tokens = defaults["block_tokens"]

    # ---- token tile: multiple of 16 (bf16 sublane packing) ----------------
    tm = min(block_tokens, _round_up(tokens, 16))
    tm = max(16, (tm // 16) * 16)

    # ---- shrink tm until the footprint fits ~85% of this chip's VMEM -------
    vmem_cap = int(0.85 * _vmem_capacity_bytes(gen))
    itm = jnp.dtype(compute_dtype).itemsize
    ito = jnp.dtype(out_dtype).itemsize
    while tm > 16:
        fp = _vmem_footprint(tm, th, dim, weight_bufs, itm, ito)
        if int(fp * 1.15) <= vmem_cap:
            break
        tm = max(16, ((tm // 2) // 16) * 16)

    # ---- on v7x make sure the 'parallel' token axis can shard over 2 TCs ---
    if auto_tokens and gen == "v7x":
        while _round_up(tokens, tm) // tm < 2 and tm > 16:
            tm = max(16, ((tm // 2) // 16) * 16)

    tokens_padded = _round_up(tokens, tm)
    n_tok = tokens_padded // tm

    footprint = _vmem_footprint(tm, th, dim, weight_bufs, itm, ito)
    vmem_limit = int(max(32 << 20, footprint * 1.25))
    vmem_limit = min(vmem_limit, vmem_cap)   # never over-commit (v7x: 64 MiB/TC)
    vmem_limit = max(vmem_limit, 16 << 20)

    # ---- operand prep (activations only; weights already laid out) ---------
    if tokens_padded != tokens:
        x2d = jnp.pad(x2d, ((0, tokens_padded - tokens), (0, 0)))
    xc = x2d.astype(compute_dtype)

    # Weight streams: one contiguous slab per hidden tile; v5e gets a 3rd
    # buffer to hide the cold weight fetch at each new token tile.
    w_pm = {} if weight_bufs == 2 else {"pipeline_mode": pl.Buffered(weight_bufs)}
    w13_spec = pl.BlockSpec((pl.Squeezed(), dim, 2 * th),
                            lambda i, k: (k, 0, 0), **w_pm)
    w2_spec = pl.BlockSpec((pl.Squeezed(), th, dim),
                           lambda i, k: (k, 0, 0), **w_pm)

    kernel = functools.partial(_ffn_kernel, th=th)

    out = pl.pallas_call(
        kernel,
        out_shape=jax.ShapeDtypeStruct((tokens_padded, dim), out_dtype),
        grid_spec=pltpu.PrefetchScalarGridSpec(
            num_scalar_prefetch=0,
            grid=(n_tok, nk),
            in_specs=[
                pl.BlockSpec((tm, dim), lambda i, k: (i, 0)),   # x token tile
                w13_spec,                                       # fused w1|w3 slab k
                w2_spec,                                        # w2 slab k
            ],
            out_specs=pl.BlockSpec((tm, dim), lambda i, k: (i, 0)),
            scratch_shapes=[pltpu.VMEM((tm, dim), jnp.float32)],
        ),
        compiler_params=pltpu.CompilerParams(
            dimension_semantics=("parallel", "arbitrary"),
            vmem_limit_bytes=vmem_limit,
        ),
    )(xc, w13, w2t)

    if tokens_padded != tokens:
        out = out[:tokens]
    return out.reshape(orig_shape)


def feed_forward(x, w1, w2, w3, *, block_tokens=None, block_hidden=512,
                 compute_dtype=jnp.bfloat16):
    """Convenience one-shot API.  For repeated forward passes, call
    `prepare_ffn_weights` once at init and use `feed_forward_prepared`."""
    w13, w2t = prepare_ffn_weights(w1, w2, w3, block_hidden=block_hidden,
                                   compute_dtype=compute_dtype)
    return feed_forward_prepared(x, w13, w2t, block_tokens=block_tokens)


# --------------------------------------------------------------------------- #
# Pure-JAX reference mirroring the kernel's precision policy
# --------------------------------------------------------------------------- #
def _reference(x, w1, w2, w3, compute_dtype=jnp.bfloat16):
    orig_shape = x.shape
    x2d = x.reshape(-1, orig_shape[-1]).astype(compute_dtype)
    h1 = jnp.dot(x2d, w1.T.astype(compute_dtype), preferred_element_type=jnp.float32)
    h3 = jnp.dot(x2d, w3.T.astype(compute_dtype), preferred_element_type=jnp.float32)
    g = (h1 * jax.nn.sigmoid(h1)) * h3
    out = jnp.dot(g.astype(compute_dtype), w2.T.astype(compute_dtype),
                  preferred_element_type=jnp.float32)
    return out.astype(x.dtype).reshape(orig_shape)


if __name__ == "__main__":
    # RainLLMConfig-like settings (small but MXU/lane aligned):
    #   dim=128, hidden_dim=None, multiple_of=64, dropout=0.0
    #   hidden = 4*128 = 512 ; int(2*512/3) = 341 ; round up to 64 -> 384
    dim = 128
    multiple_of = 64
    hidden = 4 * dim
    hidden = int(2 * hidden / 3)
    hidden = multiple_of * ((hidden + multiple_of - 1) // multiple_of)  # 384

    batch, seq = 2, 64

    key = jax.random.PRNGKey(0)
    kx, k1, k2, k3 = jax.random.split(key, 4)

    x = jax.random.normal(kx, (batch, seq, dim), dtype=jnp.float32)
    # nn.Linear weights in PyTorch (out_features, in_features) layout.
    w1 = jax.random.normal(k1, (hidden, dim), dtype=jnp.float32) * 0.05
    w2 = jax.random.normal(k2, (dim, hidden), dtype=jnp.float32) * 0.05
    w3 = jax.random.normal(k3, (hidden, dim), dtype=jnp.float32) * 0.05

    ref = _reference(x, w1, w2, w3)

    # (a) Explicit small tiles so the test exercises both grid axes + the
    #     hidden-axis accumulation: token grid 128/64=2, hidden grid 384/128=3.
    w13_s, w2t_s = prepare_ffn_weights(w1, w2, w3, block_hidden=128)
    out_small = feed_forward_prepared(x, w13_s, w2t_s, block_tokens=64)
    jax.block_until_ready(out_small)
    assert out_small.shape == (batch, seq, dim)
    assert jnp.allclose(out_small, ref, atol=1e-2, rtol=1e-2), (
        float(jnp.max(jnp.abs(out_small - ref))))

    # (b) Auto per-generation tiling; weights prepared once (hot-path style).
    w13, w2t = prepare_ffn_weights(w1, w2, w3)
    out_auto = feed_forward_prepared(x, w13, w2t)
    jax.block_until_ready(out_auto)
    assert jnp.allclose(out_auto, ref, atol=1e-2, rtol=1e-2), (
        float(jnp.max(jnp.abs(out_auto - ref))))

    # (c) Convenience one-shot wrapper (prep + call).
    out_conv = feed_forward(x, w1, w2, w3)
    jax.block_until_ready(out_conv)
    assert jnp.allclose(out_conv, ref, atol=1e-2, rtol=1e-2), (
        float(jnp.max(jnp.abs(out_conv - ref))))

    print("KERNEL_OK")
</pallas_src>

<mosaic_0001>
module attributes {stable_mosaic.version = 11 : i64} {
  func.func @_ffn_kernel(%arg0: i32, %arg1: i32, %arg2: memref<64x128xbf16, #tpu.memory_space<vmem>>, %arg3: memref<1x128x256xbf16, #tpu.memory_space<vmem>>, %arg4: memref<1x128x128xbf16, #tpu.memory_space<vmem>>, %arg5: memref<64x128xf32, #tpu.memory_space<vmem>>, %arg6: memref<64x128xf32, #tpu.memory_space<vmem>>) attributes {dimension_semantics = [#tpu.dimension_semantics<parallel>, #tpu.dimension_semantics<arbitrary>], iteration_bounds = array<i64: 2, 3>, scalar_prefetch = 0 : i64, scratch_operands = 1 : i64, tpu.core_type = #tpu.core_type<tc>, window_params = [{transform_indices = @transform_0, window_bounds = array<i64: 64, 128>}, {transform_indices = @transform_1, window_bounds = array<i64: 1, 128, 256>}, {transform_indices = @transform_2, window_bounds = array<i64: 1, 128, 128>}, {transform_indices = @transform_3, window_bounds = array<i64: 64, 128>}]} {
    %c0_i32 = arith.constant 0 : i32
    %0 = arith.cmpi eq, %arg1, %c0_i32 : i32
    %1 = arith.extui %0 : i1 to i32
    %c0_i32_0 = arith.constant 0 : i32
    %2 = arith.cmpi ne, %1, %c0_i32_0 : i32
    scf.if %2 {
      %cst_15 = arith.constant 0.000000e+00 : f32
      %26 = vector.broadcast %cst_15 : f32 to vector<64x128xf32>
      %c0_16 = arith.constant 0 : index
      %c0_17 = arith.constant 0 : index
      %27 = vector.load %arg6[%c0_16, %c0_17] : memref<64x128xf32, #tpu.memory_space<vmem>>, vector<64x128xf32>
      tpu.vector_store %arg6[%c0_16, %c0_17], %26 {strides = array<i32>} : memref<64x128xf32, #tpu.memory_space<vmem>>, vector<64x128xf32>,
    } else {
    }
    %c0 = arith.constant 0 : index
    %c0_1 = arith.constant 0 : index
    %3 = vector.load %arg2[%c0, %c0_1] : memref<64x128xbf16, #tpu.memory_space<vmem>>, vector<64x128xbf16>
    %c0_2 = arith.constant 0 : index
    %c0_3 = arith.constant 0 : index
    %c0_4 = arith.constant 0 : index
    %4 = vector.load %arg3[%c0_2, %c0_3, %c0_4] : memref<1x128x256xbf16, #tpu.memory_space<vmem>>, vector<1x128x256xbf16>
    %5 = vector.shape_cast %4 : vector<1x128x256xbf16> to vector<128x256xbf16>
    %cst = arith.constant dense<0.000000e+00> : vector<64x256xf32>
    %6 = tpu.matmul %3, %5, %cst {dimension_numbers = #tpu.dot_dimension_numbers<[1], [0], [0], [1], [0, 0, 1, 1], [], []>} : vector<64x128xbf16>, vector<128x256xbf16>, vector<64x256xf32> -> vector<64x256xf32>
    %7 = vector.extract_strided_slice %6 {offsets = [0, 0], sizes = [64, 128], strides = [1, 1]} : vector<64x256xf32> to vector<64x128xf32>
    %8 = vector.extract_strided_slice %6 {offsets = [0, 128], sizes = [64, 128], strides = [1, 1]} : vector<64x256xf32> to vector<64x128xf32>
    %9 = arith.negf %7 : vector<64x128xf32>
    %10 = math.exp %9 : vector<64x128xf32>
    %cst_5 = arith.constant 1.000000e+00 : f32
    %11 = vector.broadcast %cst_5 : f32 to vector<64x128xf32>
    %12 = arith.addf %11, %10 : vector<64x128xf32>
    %13 = arith.divf %11, %12 : vector<64x128xf32>
    %14 = arith.mulf %7, %13 : vector<64x128xf32>
    %15 = arith.mulf %14, %8 : vector<64x128xf32>
    %c0_6 = arith.constant 0 : index
    %c0_7 = arith.constant 0 : index
    %16 = vector.load %arg6[%c0_6, %c0_7] : memref<64x128xf32, #tpu.memory_space<vmem>>, vector<64x128xf32>
    %17 = arith.truncf %15 : vector<64x128xf32> to vector<64x128xbf16>
    %c0_8 = arith.constant 0 : index
    %c0_9 = arith.constant 0 : index
    %c0_10 = arith.constant 0 : index
    %18 = vector.load %arg4[%c0_8, %c0_9, %c0_10] : memref<1x128x128xbf16, #tpu.memory_space<vmem>>, vector<1x128x128xbf16>
    %19 = vector.shape_cast %18 : vector<1x128x128xbf16> to vector<128x128xbf16>
    %cst_11 = arith.constant dense<0.000000e+00> : vector<64x128xf32>
    %20 = tpu.matmul %17, %19, %cst_11 {dimension_numbers = #tpu.dot_dimension_numbers<[1], [0], [0], [1], [0, 0, 1, 1], [], []>} : vector<64x128xbf16>, vector<128x128xbf16>, vector<64x128xf32> -> vector<64x128xf32>
    %21 = arith.addf %16, %20 : vector<64x128xf32>
    %c0_12 = arith.constant 0 : index
    %c0_13 = arith.constant 0 : index
    %22 = vector.load %arg6[%c0_12, %c0_13] : memref<64x128xf32, #tpu.memory_space<vmem>>, vector<64x128xf32>
    tpu.vector_store %arg6[%c0_12, %c0_13], %21 {strides = array<i32>} : memref<64x128xf32, #tpu.memory_space<vmem>>, vector<64x128xf32>,
    %c2_i32 = arith.constant 2 : i32
    %23 = arith.cmpi eq, %arg1, %c2_i32 : i32
    %24 = arith.extui %23 : i1 to i32
    %c0_i32_14 = arith.constant 0 : i32
    %25 = arith.cmpi ne, %24, %c0_i32_14 : i32
    scf.if %25 {
      %c0_15 = arith.constant 0 : index
      %c0_16 = arith.constant 0 : index
      %26 = vector.load %arg6[%c0_15, %c0_16] : memref<64x128xf32, #tpu.memory_space<vmem>>, vector<64x128xf32>
      %c0_17 = arith.constant 0 : index
      %c0_18 = arith.constant 0 : index
      %27 = vector.load %arg5[%c0_17, %c0_18] : memref<64x128xf32, #tpu.memory_space<vmem>>, vector<64x128xf32>
      tpu.vector_store %arg5[%c0_17, %c0_18], %26 {strides = array<i32>} : memref<64x128xf32, #tpu.memory_space<vmem>>, vector<64x128xf32>,
    } else {
    }
    return
  }
  func.func @transform_0(%arg0: i32, %arg1: i32) -> (i32, i32) {
    %c0_i32 = arith.constant 0 : i32
    %c0_i32_0 = arith.constant 0 : i32
    return %arg0, %c0_i32 : i32, i32
  }
  func.func @transform_1(%arg0: i32, %arg1: i32) -> (i32, i32, i32) {
    %c0_i32 = arith.constant 0 : i32
    %c0_i32_0 = arith.constant 0 : i32
    %c0_i32_1 = arith.constant 0 : i32
    return %arg1, %c0_i32, %c0_i32_0 : i32, i32, i32
  }
  func.func @transform_2(%arg0: i32, %arg1: i32) -> (i32, i32, i32) {
    %c0_i32 = arith.constant 0 : i32
    %c0_i32_0 = arith.constant 0 : i32
    %c0_i32_1 = arith.constant 0 : i32
    return %arg1, %c0_i32, %c0_i32_0 : i32, i32, i32
  }
  func.func @transform_3(%arg0: i32, %arg1: i32) -> (i32, i32) {
    %c0_i32 = arith.constant 0 : i32
    %c0_i32_0 = arith.constant 0 : i32
    return %arg0, %c0_i32 : i32, i32
  }
}

</mosaic_0001>

<llo_original>
// kernel: tpu_custom_call.1
$region0: #{tpu_custom_call.1}
  #allocation0 [shape = 'u32[]', space=smem, size = 0x4, offset = 0x4, fixed_abs, tag = 'smem constant byte address 0x4 - core index']
  #allocation1 [shape = 'u32[144,128]{1,0:T(1,128)}', space=vmem, size = 0x12000, scoped, tag = 'internal scratch']
  #allocation2 [shape = 'f32[64,128]{1,0:T(8,128)}', space=vmem, size = 0x8000, scoped, tag = 'scratch operand']
  %s0 = inlined_call_operand.hbm [shape: bf16[128,128], index: 0, kind: input, shape index: {}]
  %s1 = inlined_call_operand.hbm [shape: bf16[3,128,256], index: 1, kind: input, shape index: {}]
  %s2 = inlined_call_operand.hbm [shape: bf16[3,128,128], index: 2, kind: input, shape index: {}]
  %s3 = inlined_call_operand.hbm [shape: f32[128,128], index: 3, kind: output, shape index: {}]
  %s4 = sld [smem:[#allocation0]]
  $region65: #{tpu_custom_call.1} parent=0
    _
  %s6 = ssub.s32 1, %s4
  %s7 = scalar_select 0, %s6, %s4
  $region1: #{tpu_custom_call.1} parent=0
    #allocation3 [shape = 'u8[32768]{0}', space=vmem, size = 0x8000, scoped, tag = 'input window, operand 0']
    #allocation4 [shape = 's32[2]{0}', space=sflag, size = 0x8, scoped, tag = 'scoped memory for tpu_custom_call.1']
    #allocation5 [shape = 's32[2]{0}', space=sflag, size = 0x8, scoped, tag = 'scoped memory for tpu_custom_call.1']
    #allocation6 [shape = 'u8[131072]{0}', space=vmem, size = 0x20000, scoped, tag = 'input window, operand 1']
    #allocation7 [shape = 's32[2]{0}', space=sflag, size = 0x8, scoped, tag = 'scoped memory for tpu_custom_call.1']
    #allocation8 [shape = 'u8[65536]{0}', space=vmem, size = 0x10000, scoped, tag = 'input window, operand 2']
    #allocation9 [shape = 'u8[65536]{0}', space=vmem, size = 0x10000, scoped, tag = 'output window, operand 0']
    %8 = vsyncpa [#allocation4], 0
    %s9 = scalar_lea.sflag [#allocation4], 1
    %10 = vsyncpa %s9, 0
    %11 = vsyncpa [#allocation7], 0
    %s12 = scalar_lea.sflag [#allocation7], 1
    %13 = vsyncpa %s12, 0
    %14 = vsyncpa [#allocation5], 0
    %s15 = scalar_lea.sflag [#allocation5], 1
    %16 = vsyncpa %s15, 0
    loop: start=0, step=1, limit=8
    $region2: #{tpu_custom_call.1} parent=1 // loop_pre_header
      _
    $region3: #{tpu_custom_call.1} parent=1 // loop_header
      %s18 = sphi 0, %s22
      %p19 = scmp.ge.s32.totalorder %s18, 8
      %s25 = sphi 0, %s37
      %s26 = sphi 0, %s33
      %s27 = sphi 0, %s25
      %s28 = sphi 0, %s26
      %s29 = sphi 0, %s27
      %s30 = sphi 0, %s28
      %s40 = sphi 0, %s42
      %s43 = sphi 0, %s40
      %s44 = sphi 0, %s43
      %s60 = sphi 0, %s44
      %s66 = sphi 0, %s68
      %s69 = sphi 0, %s66
      %s70 = sphi 0, %s69
      %s86 = sphi 0, %s70
      %s92 = sphi 0, %s94
      %s95 = sphi 0, %s92
      %s96 = sphi 0, %s95
      %s112 = sphi 0, %s96
      %s118 = sphi 0, %s120
      %s121 = sphi 0, %s118
      %s122 = sphi 0, %s121
      %s138 = sphi 0, %s122
    $region4: #{tpu_custom_call.1} parent=1 // loop_header_branch
      %21 = sbr.rel (%p19) target = $region8
    $region5: #{tpu_custom_call.1} parent=1 // loop_body
      %s23 = ssub.s32 %s18, 1
      %s24 = ssub.s32 %s18, 2
      %s31 = sadd.s32 1, %s26
      %p32 = scmp.ge.s32.totalorder %s31, 3
      %s33 = scalar_select %p32, 0, %s31
      %s34 = sadd.s32 1, %s25
      %s35 = scalar_select %p32, %s34, %s25
      %p36 = scmp.ge.s32.totalorder %s35, 2
      %s37 = scalar_select %p36, 0, %s35
      %s38 = ssub.s32 %s25, %s37
      %p39 = scmp.eq.s32.totalorder %s38, 0
      %s41 = sadd.s32 %s40, 1
      %s42 = scalar_select %p39, %s40, %s41
      %p45 = pneg %p39
      %p46 = scmp.eq.s32.totalorder %s18, 5
      %p47 = por %p45, %p46
      %p48 = scmp.ne.s32.totalorder %s40, %s43
      %p49 = scmp.eq.s32.totalorder %s18, 0
      %p50 = por %p48, %p49
      %p51 = scmp.ne.s32.totalorder %s40, %s43
      %p52 = scmp.eq.s32.totalorder %s23, 5
      %p53 = por %p51, %p52
      %p54 = scmp.ne.s32.totalorder %s43, %s44
      %p55 = scmp.eq.s32.totalorder %s23, 0
      %p56 = por %p54, %p55
      %p57 = scmp.ne.s32.totalorder %s43, %s44
      %p58 = scmp.eq.s32.totalorder %s24, 5
      %p59 = por %p57, %p58
      %p61 = scmp.ne.s32.totalorder %s44, %s60
      %p62 = scmp.eq.s32.totalorder %s24, 0
      %p63 = por %p61, %p62
      %s64 = ssub.s32 %s26, %s33
      %p65 = scmp.eq.s32.totalorder %s64, 0
      %s67 = sadd.s32 %s66, 1
      %s68 = scalar_select %p65, %s66, %s67
      %p71 = pneg %p65
      %p72 = scmp.eq.s32.totalorder %s18, 5
      %p73 = por %p71, %p72
      %p74 = scmp.ne.s32.totalorder %s66, %s69
      %p75 = scmp.eq.s32.totalorder %s18, 0
      %p76 = por %p74, %p75
      %p77 = scmp.ne.s32.totalorder %s66, %s69
      %p78 = scmp.eq.s32.totalorder %s23, 5
      %p79 = por %p77, %p78
      %p80 = scmp.ne.s32.totalorder %s69, %s70
      %p81 = scmp.eq.s32.totalorder %s23, 0
      %p82 = por %p80, %p81
      %p83 = scmp.ne.s32.totalorder %s69, %s70
      %p84 = scmp.eq.s32.totalorder %s24, 5
      %p85 = por %p83, %p84
      %p87 = scmp.ne.s32.totalorder %s70, %s86
      %p88 = scmp.eq.s32.totalorder %s24, 0
      %p89 = por %p87, %p88
      %s90 = ssub.s32 %s26, %s33
      %p91 = scmp.eq.s32.totalorder %s90, 0
      %s93 = sadd.s32 %s92, 1
      %s94 = scalar_select %p91, %s92, %s93
      %p97 = pneg %p91
      %p98 = scmp.eq.s32.totalorder %s18, 5
      %p99 = por %p97, %p98
      %p100 = scmp.ne.s32.totalorder %s92, %s95
      %p101 = scmp.eq.s32.totalorder %s18, 0
      %p102 = por %p100, %p101
      %p103 = scmp.ne.s32.totalorder %s92, %s95
      %p104 = scmp.eq.s32.totalorder %s23, 5
      %p105 = por %p103, %p104
      %p106 = scmp.ne.s32.totalorder %s95, %s96
      %p107 = scmp.eq.s32.totalorder %s23, 0
      %p108 = por %p106, %p107
      %p109 = scmp.ne.s32.totalorder %s95, %s96
      %p110 = scmp.eq.s32.totalorder %s24, 5
      %p111 = por %p109, %p110
      %p113 = scmp.ne.s32.totalorder %s96, %s112
      %p114 = scmp.eq.s32.totalorder %s24, 0
      %p115 = por %p113, %p114
      %s116 = ssub.s32 %s25, %s37
      %p117 = scmp.eq.s32.totalorder %s116, 0
      %s119 = sadd.s32 %s118, 1
      %s120 = scalar_select %p117, %s118, %s119
      %p123 = pneg %p117
      %p124 = scmp.eq.s32.totalorder %s18, 5
      %p125 = por %p123, %p124
      %p126 = scmp.ne.s32.totalorder %s118, %s121
      %p127 = scmp.eq.s32.totalorder %s18, 0
      %p128 = por %p126, %p127
      %p129 = scmp.ne.s32.totalorder %s118, %s121
      %p130 = scmp.eq.s32.totalorder %s23, 5
      %p131 = por %p129, %p130
      %p132 = scmp.ne.s32.totalorder %s121, %s122
      %p133 = scmp.eq.s32.totalorder %s23, 0
      %p134 = por %p132, %p133
      %p135 = scmp.ne.s32.totalorder %s121, %s122
      %p136 = scmp.eq.s32.totalorder %s24, 5
      %p137 = por %p135, %p136
      %p139 = scmp.ne.s32.totalorder %s122, %s138
      %p140 = scmp.eq.s32.totalorder %s24, 0
      %p141 = por %p139, %p140
      %p142 = scmp.le.s32.totalorder 1, %s18
      %p143 = scmp.lt.s32.totalorder %s18, 7
      %p144 = pnand %p142, %p143
      %p145 = pneg %p144
      // Predicated region
      $region9: #{tpu_custom_call.1} parent=5 // pred_check
        _
      $region10: #{tpu_custom_call.1} parent=5 // pred_check_branch
        %147 = sbr.rel (%p144) target = $region12
      $region11: #{tpu_custom_call.1} parent=5 // pred_region
        %s148 = ssub.s32 %s18, 1
      $region12: #{tpu_custom_call.1} parent=5 // pred_fallthru
        _
      %p149 = scmp.lt.s32.totalorder %s18, 6
      // Predicated region
      $region13: #{tpu_custom_call.1} parent=5 // pred_check
        %p150 = pneg %p149
      $region14: #{tpu_custom_call.1} parent=5 // pred_check_branch
        %152 = sbr.rel (%p150) target = $region16
      $region15: #{tpu_custom_call.1} parent=5 // pred_region
        // Predicated region
        $region17: #{tpu_custom_call.1} parent=15 // pred_check
          %p153 = pneg %p50
        $region18: #{tpu_custom_call.1} parent=15 // pred_check_branch
          %155 = sbr.rel (%p153) target = $region20
        $region19: #{tpu_custom_call.1} parent=15 // pred_region
          %s156 = sand.u32 %s40, 1
          %s157 = scalar_lea.sflag [#allocation4], %s156
          %s158 = sand.u32 %s40, 1
          %s159 = smul.addr %s158, 32
          %s160 = scalar_lea.vmem [#allocation3], %s159
          %s161 = smul.u32 8, %s25
          %s163 = ssub.s32 512, 512
          %164 = vsyncadd %s157, %s163
          %s165 = smul.addr %s161, 64
          %s166 = scalar_lea.hbm %s0, %s165
          %s167 = sshll.u32 %s160, 4
          %s168 = int_to_ptr.vmem [resolvable:$true] %s167
          %173 = dma.hbm_to_vmem [thread:$0]  %s166, 512, %s168, %s157, 64, 64, 4
        $region20: #{tpu_custom_call.1} parent=15 // pred_fallthru
          _
        // Predicated region
        $region21: #{tpu_custom_call.1} parent=15 // pred_check
          %p174 = pneg %p76
        $region22: #{tpu_custom_call.1} parent=15 // pred_check_branch
          %176 = sbr.rel (%p174) target = $region24
        $region23: #{tpu_custom_call.1} parent=15 // pred_region
          %s177 = sand.u32 %s18, 1
          %s178 = scalar_lea.sflag [#allocation7], %s177
          %s179 = sand.u32 %s66, 1
          %s180 = smul.addr %s179, 128
          %s181 = scalar_lea.vmem [#allocation6], %s180
          %s183 = ssub.s32 2048, 2048
          %184 = vsyncadd %s178, %s183
          %s185 = smul.addr %s26, 32
          %s186 = smul.addr %s185, 64
          %s187 = scalar_lea.hbm %s1, %s186
          %s188 = sshll.u32 %s181, 4
          %s189 = int_to_ptr.vmem [resolvable:$true] %s188
          %194 = dma.hbm_to_vmem [thread:$0]  %s187, 2048, %s189, %s178, 128, 128, 8
        $region24: #{tpu_custom_call.1} parent=15 // pred_fallthru
          _
        // Predicated region
        $region25: #{tpu_custom_call.1} parent=15 // pred_check
          %p195 = pneg %p102
        $region26: #{tpu_custom_call.1} parent=15 // pred_check_branch
          %197 = sbr.rel (%p195) target = $region28
        $region27: #{tpu_custom_call.1} parent=15 // pred_region
          %s198 = sand.u32 %s18, 1
          %s199 = scalar_lea.sflag [#allocation7], %s198
          %s200 = sand.u32 %s92, 1
          %s201 = smul.addr %s200, 64
          %s202 = scalar_lea.vmem [#allocation8], %s201
          %s204 = ssub.s32 1024, 1024
          %205 = vsyncadd %s199, %s204
          %s206 = smul.addr %s26, 16
          %s207 = smul.addr %s206, 64
          %s208 = scalar_lea.hbm %s2, %s207
          %s209 = sshll.u32 %s202, 4
          %s210 = int_to_ptr.vmem [resolvable:$true] %s209
          %215 = dma.hbm_to_vmem [thread:$0]  %s208, 1024, %s210, %s199, 64, 64, 4
        $region28: #{tpu_custom_call.1} parent=15 // pred_fallthru
          _
      $region16: #{tpu_custom_call.1} parent=5 // pred_fallthru
        _
      %p216 = scmp.le.s32.totalorder 1, %s18
      %p217 = scmp.lt.s32.totalorder %s18, 7
      %p218 = pnand %p216, %p217
      %p219 = pneg %p218
      // Predicated region
      $region29: #{tpu_custom_call.1} parent=5 // pred_check
        _
      $region30: #{tpu_custom_call.1} parent=5 // pred_check_branch
        %221 = sbr.rel (%p218) target = $region32
      $region31: #{tpu_custom_call.1} parent=5 // pred_region
        %s222 = ssub.s32 %s18, 1
        %s223 = sand.u32 %s43, 1
        %s224 = scalar_lea.sflag [#allocation4], %s223
        %s225 = sand.u32 %s43, 1
        %s226 = smul.addr %s225, 32
        %s227 = scalar_lea.vmem [#allocation3], %s226
        // Predicated region
        $region33: #{tpu_custom_call.1} parent=31 // pred_check
          %p228 = pneg %p56
        $region34: #{tpu_custom_call.1} parent=31 // pred_check_branch
          %230 = sbr.rel (%p228) target = $region36
        $region35: #{tpu_custom_call.1} parent=31 // pred_region
          %231 = dma.done %s224, 512
        $region36: #{tpu_custom_call.1} parent=31 // pred_fallthru
          _
        %s232 = sand.u32 %s23, 1
        %s233 = scalar_lea.sflag [#allocation7], %s232
        %s234 = sand.u32 %s69, 1
        %s235 = smul.addr %s234, 128
        %s236 = scalar_lea.vmem [#allocation6], %s235
        // Predicated region
        $region37: #{tpu_custom_call.1} parent=31 // pred_check
          %p237 = pneg %p82
        $region38: #{tpu_custom_call.1} parent=31 // pred_check_branch
          %239 = sbr.rel (%p237) target = $region40
        $region39: #{tpu_custom_call.1} parent=31 // pred_region
          %240 = dma.done %s233, 2048
        $region40: #{tpu_custom_call.1} parent=31 // pred_fallthru
          _
        %s241 = sand.u32 %s23, 1
        %s242 = scalar_lea.sflag [#allocation7], %s241
        %s243 = sand.u32 %s95, 1
        %s244 = smul.addr %s243, 64
        %s245 = scalar_lea.vmem [#allocation8], %s244
        // Predicated region
        $region41: #{tpu_custom_call.1} parent=31 // pred_check
          %p246 = pneg %p108
        $region42: #{tpu_custom_call.1} parent=31 // pred_check_branch
          %248 = sbr.rel (%p246) target = $region44
        $region43: #{tpu_custom_call.1} parent=31 // pred_region
          %249 = dma.done %s242, 1024
        $region44: #{tpu_custom_call.1} parent=31 // pred_fallthru
          _
        %s250 = sand.u32 %s43, 1
        %s251 = scalar_lea.sflag [#allocation4], %s250
        %s252 = sand.u32 %s43, 1
        %s253 = smul.addr %s252, 32
        %s254 = scalar_lea.vmem [#allocation3], %s253
        %p255 = pneg %p56
        %p256 = pneg %p53
        %s257 = sand.u32 %s23, 1
        %s258 = scalar_lea.sflag [#allocation7], %s257
        %s259 = sand.u32 %s69, 1
        %s260 = smul.addr %s259, 128
        %s261 = scalar_lea.vmem [#allocation6], %s260
        %p262 = pneg %p82
        %p263 = pneg %p79
        %s264 = sand.u32 %s23, 1
        %s265 = scalar_lea.sflag [#allocation7], %s264
        %s266 = sand.u32 %s95, 1
        %s267 = smul.addr %s266, 64
        %s268 = scalar_lea.vmem [#allocation8], %s267
        %p269 = pneg %p108
        %p270 = pneg %p105
        %p271 = pneg %p134
        %p272 = pneg %p131
        %s273 = sand.u32 %s121, 1
        %s274 = scalar_lea.sflag [#allocation5], %s273
        %s275 = sand.u32 %s121, 1
        %s276 = smul.addr %s275, 64
        %s277 = scalar_lea.vmem [#allocation9], %s276
        %s278 = smul.u32 8, %s27
        %s279 = smul.u32 8, %s27
        %p281 = scmp.eq.s32.totalorder %s28, 0
        // Predicated region
        $region45: #{tpu_custom_call.1} parent=31 // pred_check
          %p282 = pneg %p281
        $region46: #{tpu_custom_call.1} parent=31 // pred_check_branch
          %284 = sbr.rel (%p282) target = $region48
        $region47: #{tpu_custom_call.1} parent=31 // pred_region
          %285 = vst [vmem:[#allocation2] sm:$0xff] 0.0
          %286 = vst [vmem:[#allocation2 + $0x8] sm:$0xff] 0.0
          %287 = vst [vmem:[#allocation2 + $0x10] sm:$0xff] 0.0
          %288 = vst [vmem:[#allocation2 + $0x18] sm:$0xff] 0.0
          %289 = vst [vmem:[#allocation2 + $0x20] sm:$0xff] 0.0
          %290 = vst [vmem:[#allocation2 + $0x28] sm:$0xff] 0.0
          %291 = vst [vmem:[#allocation2 + $0x30] sm:$0xff] 0.0
          %292 = vst [vmem:[#allocation2 + $0x38] sm:$0xff] 0.0
        $region48: #{tpu_custom_call.1} parent=31 // pred_fallthru
          _
        %v293 = vld [vmem:[%s227] sm:$0xf]
        %v294 = vld [vmem:[%s227 + $0x4] sm:$0xf]
        %v295 = vld [vmem:[%s227 + $0x8] sm:$0xf]
        %v296 = vld [vmem:[%s227 + $0xc] sm:$0xf]
        %v297 = vld [vmem:[%s227 + $0x10] sm:$0xf]
        %v298 = vld [vmem:[%s227 + $0x14] sm:$0xf]
        %v299 = vld [vmem:[%s227 + $0x18] sm:$0xf]
        %v300 = vld [vmem:[%s227 + $0x1c] sm:$0xf]
        %v301 = vld [vmem:[%s236] sm:$0xff]
        %v302 = vld [vmem:[%s236 + $0x8] sm:$0xff]
        %v303 = vld [vmem:[%s236 + $0x10] sm:$0xff]
        %v304 = vld [vmem:[%s236 + $0x18] sm:$0xff]
        %v305 = vld [vmem:[%s236 + $0x20] sm:$0xff]
        %v306 = vld [vmem:[%s236 + $0x28] sm:$0xff]
        %v307 = vld [vmem:[%s236 + $0x30] sm:$0xff]
        %v308 = vld [vmem:[%s236 + $0x38] sm:$0xff]
        %v309 = vld [vmem:[%s236 + $0x40] sm:$0xff]
        %v310 = vld [vmem:[%s236 + $0x48] sm:$0xff]
        %v311 = vld [vmem:[%s236 + $0x50] sm:$0xff]
        %v312 = vld [vmem:[%s236 + $0x58] sm:$0xff]
        %v313 = vld [vmem:[%s236 + $0x60] sm:$0xff]
        %v314 = vld [vmem:[%s236 + $0x68] sm:$0xff]
        %v315 = vld [vmem:[%s236 + $0x70] sm:$0xff]
        %v316 = vld [vmem:[%s236 + $0x78] sm:$0xff]
        %v325 = vunpack.c.l.b16 %v293
        %v326 = vunpack.c.l.b16 %v294
        %v327 = vunpack.c.l.b16 %v295
        %v328 = vunpack.c.l.b16 %v296
        %v329 = vunpack.c.l.b16 %v297
        %v330 = vunpack.c.l.b16 %v298
        %v331 = vunpack.c.l.b16 %v299
        %v332 = vunpack.c.l.b16 %v300
        %v333 = vpack.c.b16 %v326, %v325
        %v334 = vpack.c.b16 %v328, %v327
        %v335 = vpack.c.b16 %v330, %v329
        %v336 = vpack.c.b16 %v332, %v331
        %v357 = vunpack.c.l.b16 %v301
        %v358 = vunpack.c.h.b16 %v301
        %v359 = vunpack.c.l.b16 %v302
        %v360 = vunpack.c.h.b16 %v302
        %v361 = vunpack.c.l.b16 %v303
        %v362 = vunpack.c.h.b16 %v303
        %v363 = vunpack.c.l.b16 %v304
        %v364 = vunpack.c.h.b16 %v304
        %v365 = vunpack.c.l.b16 %v305
        %v366 = vunpack.c.h.b16 %v305
        %v367 = vunpack.c.l.b16 %v306
        %v368 = vunpack.c.h.b16 %v306
        %v369 = vunpack.c.l.b16 %v307
        %v370 = vunpack.c.h.b16 %v307
        %v371 = vunpack.c.l.b16 %v308
        %v372 = vunpack.c.h.b16 %v308
        %v373 = vunpack.c.l.b16 %v309
        %v374 = vunpack.c.h.b16 %v309
        %v375 = vunpack.c.l.b16 %v310
        %v376 = vunpack.c.h.b16 %v310
        %v377 = vunpack.c.l.b16 %v311
        %v378 = vunpack.c.h.b16 %v311
        %v379 = vunpack.c.l.b16 %v312
        %v380 = vunpack.c.h.b16 %v312
        %v381 = vunpack.c.l.b16 %v313
        %v382 = vunpack.c.h.b16 %v313
        %v383 = vunpack.c.l.b16 %v314
        %v384 = vunpack.c.h.b16 %v314
        %v385 = vunpack.c.l.b16 %v315
        %v386 = vunpack.c.h.b16 %v315
        %v387 = vunpack.c.l.b16 %v316
        %v388 = vunpack.c.h.b16 %v316
        %v389 = vpack.c.b16 %v359, %v357
        %v390 = vpack.c.b16 %v360, %v358
        %v391 = vpack.c.b16 %v363, %v361
        %v392 = vpack.c.b16 %v364, %v362
        %v393 = vpack.c.b16 %v367, %v365
        %v394 = vpack.c.b16 %v368, %v366
        %v395 = vpack.c.b16 %v371, %v369
        %v396 = vpack.c.b16 %v372, %v370
        %v397 = vpack.c.b16 %v375, %v373
        %v398 = vpack.c.b16 %v376, %v374
        %v399 = vpack.c.b16 %v379, %v377
        %v400 = vpack.c.b16 %v380, %v378
        %v401 = vpack.c.b16 %v383, %v381
        %v402 = vpack.c.b16 %v384, %v382
        %v403 = vpack.c.b16 %v387, %v385
        %v404 = vpack.c.b16 %v388, %v386
        %421 = vmatprep.subr.bf16.mxu0 %v390
        %422 = vmatpush1.bf16.msra.mxu0 %v389
        %423 = vmatprep.subr.bf16.mxu0 %v392
        %424 = vmatpush1.bf16.msra.mxu0 %v391
        %425 = vmatprep.subr.bf16.mxu0 %v394
        %426 = vmatpush1.bf16.msra.mxu0 %v393
        %427 = vmatprep.subr.bf16.mxu0 %v396
        %428 = vmatpush1.bf16.msra.mxu0 %v395
        %429 = vmatprep.subr.bf16.mxu0 %v398
        %430 = vmatpush1.bf16.msra.mxu0 %v397
        %431 = vmatprep.subr.bf16.mxu0 %v400
        %432 = vmatpush1.bf16.msra.mxu0 %v399
        %433 = vmatprep.subr.bf16.mxu0 %v402
        %434 = vmatpush1.bf16.msra.mxu0 %v401
        %435 = vmatprep.subr.bf16.mxu0 %v404
        %436 = vmatpush1.bf16.msra.mxu0 %v403
        %437 = vmatprep.subr.bf16.mxu0 0
        %438 = vmatpush1.bf16.msra.mxu0 0
        %439 = vmatprep.subr.bf16.mxu0 0
        %440 = vmatpush1.bf16.msra.mxu0 0
        %441 = vmatprep.subr.bf16.mxu0 0
        %442 = vmatpush1.bf16.msra.mxu0 0
        %443 = vmatprep.subr.bf16.mxu0 0
        %444 = vmatpush1.bf16.msra.mxu0 0
        %445 = vmatprep.subr.bf16.mxu0 0
        %446 = vmatpush1.bf16.msra.mxu0 0
        %447 = vmatprep.subr.bf16.mxu0 0
        %448 = vmatpush1.bf16.msra.mxu0 0
        %449 = vmatprep.subr.bf16.mxu0 0
        %450 = vmatpush1.bf16.msra.mxu0 0
        %451 = vmatprep.subr.bf16.mxu0 0
        %452 = vmatpush1.bf16.msra.mxu0 0
        %453 = vmatprep.mubr.bf16.mxu0 0
        %454 = vmatmul.mubr.bf16.gmra.mrb[0].mxu0 %v333
        %v455 = vpop.f32.mrb[0].mxu0
        %v456 = vadd.f32 0.0, %v455
        %v457 = vpop.f32.mrb[0].mxu0
        %v458 = vadd.f32 0.0, %v457
        %v459 = vpop.f32.mrb[0].mxu0
        %v460 = vadd.f32 0.0, %v459
        %v461 = vpop.f32.mrb[0].mxu0
        %v462 = vadd.f32 0.0, %v461
        %463 = vmatprep.mubr.bf16.mxu0 0
        %464 = vmatmul.mubr.bf16.gmra.mrb[0].mxu0 %v334
        %v465 = vpop.f32.mrb[0].mxu0
        %v466 = vadd.f32 0.0, %v465
        %v467 = vpop.f32.mrb[0].mxu0
        %v468 = vadd.f32 0.0, %v467
        %v469 = vpop.f32.mrb[0].mxu0
        %v470 = vadd.f32 0.0, %v469
        %v471 = vpop.f32.mrb[0].mxu0
        %v472 = vadd.f32 0.0, %v471
        %473 = vmatprep.mubr.bf16.mxu0 0
        %474 = vmatmul.mubr.bf16.gmra.mrb[0].mxu0 %v335
        %v475 = vpop.f32.mrb[0].mxu0
        %v476 = vadd.f32 0.0, %v475
        %v477 = vpop.f32.mrb[0].mxu0
        %v478 = vadd.f32 0.0, %v477
        %v479 = vpop.f32.mrb[0].mxu0
        %v480 = vadd.f32 0.0, %v479
        %v481 = vpop.f32.mrb[0].mxu0
        %v482 = vadd.f32 0.0, %v481
        %483 = vmatprep.mubr.bf16.mxu0 0
        %484 = vmatmul.mubr.bf16.gmra.mrb[0].mxu0 %v336
        %v485 = vpop.f32.mrb[0].mxu0
        %v486 = vadd.f32 0.0, %v485
        %v487 = vpop.f32.mrb[0].mxu0
        %v488 = vadd.f32 0.0, %v487
        %v489 = vpop.f32.mrb[0].mxu0
        %v490 = vadd.f32 0.0, %v489
        %v491 = vpop.f32.mrb[0].mxu0
        %v492 = vadd.f32 0.0, %v491
        %493 = vdwg.mxu0
        %v494 = vxor.u32 %v456, 2147483648
        %v495 = vxor.u32 %v460, 2147483648
        %v496 = vxor.u32 %v466, 2147483648
        %v497 = vxor.u32 %v470, 2147483648
        %v498 = vxor.u32 %v476, 2147483648
        %v499 = vxor.u32 %v480, 2147483648
        %v500 = vxor.u32 %v486, 2147483648
        %v501 = vxor.u32 %v490, 2147483648
        %v502 = vmul.f32 %v494, 1.442695
        %v503 = vpow.pop %v502
        %v504 = vmul.f32 %v495, 1.442695
        %v505 = vpow.pop %v504
        %v506 = vmul.f32 %v496, 1.442695
        %v507 = vpow.pop %v506
        %v508 = vmul.f32 %v497, 1.442695
        %v509 = vpow.pop %v508
        %v510 = vmul.f32 %v498, 1.442695
        %v511 = vpow.pop %v510
        %v512 = vmul.f32 %v499, 1.442695
        %v513 = vpow.pop %v512
        %v514 = vmul.f32 %v500, 1.442695
        %v515 = vpow.pop %v514
        %v516 = vmul.f32 %v501, 1.442695
        %v517 = vpow.pop %v516
        %v518 = vadd.f32 %v503, 1.0
        %v519 = vadd.f32 %v505, 1.0
        %v520 = vadd.f32 %v507, 1.0
        %v521 = vadd.f32 %v509, 1.0
        %v522 = vadd.f32 %v511, 1.0
        %v523 = vadd.f32 %v513, 1.0
        %v524 = vadd.f32 %v515, 1.0
        %v525 = vadd.f32 %v517, 1.0
        %v526 = vrcp.pop %v518
        %v527 = vmul.f32 1.0, %v526
        %v528 = vrcp.pop %v519
        %v529 = vmul.f32 1.0, %v528
        %v530 = vrcp.pop %v520
        %v531 = vmul.f32 1.0, %v530
        %v532 = vrcp.pop %v521
        %v533 = vmul.f32 1.0, %v532
        %v534 = vrcp.pop %v522
        %v535 = vmul.f32 1.0, %v534
        %v536 = vrcp.pop %v523
        %v537 = vmul.f32 1.0, %v536
        %v538 = vrcp.pop %v524
        %v539 = vmul.f32 1.0, %v538
        %v540 = vrcp.pop %v525
        %v541 = vmul.f32 1.0, %v540
        %v542 = vmul.f32 %v456, %v527
        %v543 = vmul.f32 %v460, %v529
        %v544 = vmul.f32 %v466, %v531
        %v545 = vmul.f32 %v470, %v533
        %v546 = vmul.f32 %v476, %v535
        %v547 = vmul.f32 %v480, %v537
        %v548 = vmul.f32 %v486, %v539
        %v549 = vmul.f32 %v490, %v541
        %v550 = vmul.f32 %v542, %v458
        %v551 = vmul.f32 %v543, %v462
        %v552 = vmul.f32 %v544, %v468
        %v553 = vmul.f32 %v545, %v472
        %v554 = vmul.f32 %v546, %v478
        %v555 = vmul.f32 %v547, %v482
        %v556 = vmul.f32 %v548, %v488
        %v557 = vmul.f32 %v549, %v492
        %v558 = vld [vmem:[#allocation2] sm:$0xff]
        %v559 = vld [vmem:[#allocation2 + $0x8] sm:$0xff]
        %v560 = vld [vmem:[#allocation2 + $0x10] sm:$0xff]
        %v561 = vld [vmem:[#allocation2 + $0x18] sm:$0xff]
        %v562 = vld [vmem:[#allocation2 + $0x20] sm:$0xff]
        %v563 = vld [vmem:[#allocation2 + $0x28] sm:$0xff]
        %v564 = vld [vmem:[#allocation2 + $0x30] sm:$0xff]
        %v565 = vld [vmem:[#allocation2 + $0x38] sm:$0xff]
        %v566 = vpack.c.bf16 %v551, %v550
        %v567 = vpack.c.bf16 %v553, %v552
        %v568 = vpack.c.bf16 %v555, %v554
        %v569 = vpack.c.bf16 %v557, %v556
        %v570 = vld [vmem:[%s245] sm:$0xf]
        %v571 = vld [vmem:[%s245 + $0x4] sm:$0xf]
        %v572 = vld [vmem:[%s245 + $0x8] sm:$0xf]
        %v573 = vld [vmem:[%s245 + $0xc] sm:$0xf]
        %v574 = vld [vmem:[%s245 + $0x10] sm:$0xf]
        %v575 = vld [vmem:[%s245 + $0x14] sm:$0xf]
        %v576 = vld [vmem:[%s245 + $0x18] sm:$0xf]
        %v577 = vld [vmem:[%s245 + $0x1c] sm:$0xf]
        %v578 = vld [vmem:[%s245 + $0x20] sm:$0xf]
        %v579 = vld [vmem:[%s245 + $0x24] sm:$0xf]
        %v580 = vld [vmem:[%s245 + $0x28] sm:$0xf]
        %v581 = vld [vmem:[%s245 + $0x2c] sm:$0xf]
        %v582 = vld [vmem:[%s245 + $0x30] sm:$0xf]
        %v583 = vld [vmem:[%s245 + $0x34] sm:$0xf]
        %v584 = vld [vmem:[%s245 + $0x38] sm:$0xf]
        %v585 = vld [vmem:[%s245 + $0x3c] sm:$0xf]
        %v602 = vunpack.c.l.b16 %v570
        %v603 = vunpack.c.l.b16 %v571
        %v604 = vunpack.c.l.b16 %v572
        %v605 = vunpack.c.l.b16 %v573
        %v606 = vunpack.c.l.b16 %v574
        %v607 = vunpack.c.l.b16 %v575
        %v608 = vunpack.c.l.b16 %v576
        %v609 = vunpack.c.l.b16 %v577
        %v610 = vunpack.c.l.b16 %v578
        %v611 = vunpack.c.l.b16 %v579
        %v612 = vunpack.c.l.b16 %v580
        %v613 = vunpack.c.l.b16 %v581
        %v614 = vunpack.c.l.b16 %v582
        %v615 = vunpack.c.l.b16 %v583
        %v616 = vunpack.c.l.b16 %v584
        %v617 = vunpack.c.l.b16 %v585
        %v618 = vpack.c.b16 %v603, %v602
        %v619 = vpack.c.b16 %v605, %v604
        %v620 = vpack.c.b16 %v607, %v606
        %v621 = vpack.c.b16 %v609, %v608
        %v622 = vpack.c.b16 %v611, %v610
        %v623 = vpack.c.b16 %v613, %v612
        %v624 = vpack.c.b16 %v615, %v614
        %v625 = vpack.c.b16 %v617, %v616
        %634 = vmatprep.subr.bf16.mxu0 0
        %635 = vmatpush1.bf16.msra.mxu0 %v618
        %636 = vmatprep.subr.bf16.mxu0 0
        %637 = vmatpush1.bf16.msra.mxu0 %v619
        %638 = vmatprep.subr.bf16.mxu0 0
        %639 = vmatpush1.bf16.msra.mxu0 %v620
        %640 = vmatprep.subr.bf16.mxu0 0
        %641 = vmatpush1.bf16.msra.mxu0 %v621
        %642 = vmatprep.subr.bf16.mxu0 0
        %643 = vmatpush1.bf16.msra.mxu0 %v622
        %644 = vmatprep.subr.bf16.mxu0 0
        %645 = vmatpush1.bf16.msra.mxu0 %v623
        %646 = vmatprep.subr.bf16.mxu0 0
        %647 = vmatpush1.bf16.msra.mxu0 %v624
        %648 = vmatprep.subr.bf16.mxu0 0
        %649 = vmatpush1.bf16.msra.mxu0 %v625
        %650 = vmatprep.subr.bf16.mxu0 0
        %651 = vmatpush1.bf16.msra.mxu0 0
        %652 = vmatprep.subr.bf16.mxu0 0
        %653 = vmatpush1.bf16.msra.mxu0 0
        %654 = vmatprep.subr.bf16.mxu0 0
        %655 = vmatpush1.bf16.msra.mxu0 0
        %656 = vmatprep.subr.bf16.mxu0 0
        %657 = vmatpush1.bf16.msra.mxu0 0
        %658 = vmatprep.subr.bf16.mxu0 0
        %659 = vmatpush1.bf16.msra.mxu0 0
        %660 = vmatprep.subr.bf16.mxu0 0
        %661 = vmatpush1.bf16.msra.mxu0 0
        %662 = vmatprep.subr.bf16.mxu0 0
        %663 = vmatpush1.bf16.msra.mxu0 0
        %664 = vmatprep.subr.bf16.mxu0 0
        %665 = vmatpush1.bf16.msra.mxu0 0
        %666 = vmatprep.mubr.bf16.mxu0 0
        %667 = vmatmul.mubr.bf16.gmra.mrb[0].mxu0 %v566
        %v668 = vpop.f32.mrb[0].mxu0
        %v669 = vadd.f32 0.0, %v668
        %v670 = vpop.f32.mrb[0].mxu0
        %v671 = vpop.f32.mrb[0].mxu0
        %v672 = vadd.f32 0.0, %v671
        %v673 = vpop.f32.mrb[0].mxu0
        %674 = vmatprep.mubr.bf16.mxu0 0
        %675 = vmatmul.mubr.bf16.gmra.mrb[0].mxu0 %v567
        %v676 = vpop.f32.mrb[0].mxu0
        %v677 = vadd.f32 0.0, %v676
        %v678 = vpop.f32.mrb[0].mxu0
        %v679 = vpop.f32.mrb[0].mxu0
        %v680 = vadd.f32 0.0, %v679
        %v681 = vpop.f32.mrb[0].mxu0
        %682 = vmatprep.mubr.bf16.mxu0 0
        %683 = vmatmul.mubr.bf16.gmra.mrb[0].mxu0 %v568
        %v684 = vpop.f32.mrb[0].mxu0
        %v685 = vadd.f32 0.0, %v684
        %v686 = vpop.f32.mrb[0].mxu0
        %v687 = vpop.f32.mrb[0].mxu0
        %v688 = vadd.f32 0.0, %v687
        %v689 = vpop.f32.mrb[0].mxu0
        %690 = vmatprep.mubr.bf16.mxu0 0
        %691 = vmatmul.mubr.bf16.gmra.mrb[0].mxu0 %v569
        %v692 = vpop.f32.mrb[0].mxu0
        %v693 = vadd.f32 0.0, %v692
        %v694 = vpop.f32.mrb[0].mxu0
        %v695 = vpop.f32.mrb[0].mxu0
        %v696 = vadd.f32 0.0, %v695
        %v697 = vpop.f32.mrb[0].mxu0
        %698 = vdwg.mxu0
        %v699 = vadd.f32 %v558, %v669
        %v700 = vadd.f32 %v559, %v672
        %v701 = vadd.f32 %v560, %v677
        %v702 = vadd.f32 %v561, %v680
        %v703 = vadd.f32 %v562, %v685
        %v704 = vadd.f32 %v563, %v688
        %v705 = vadd.f32 %v564, %v693
        %v706 = vadd.f32 %v565, %v696
        %707 = vst [vmem:[#allocation2] sm:$0xff] %v699
        %708 = vst [vmem:[#allocation2 + $0x8] sm:$0xff] %v700
        %709 = vst [vmem:[#allocation2 + $0x10] sm:$0xff] %v701
        %710 = vst [vmem:[#allocation2 + $0x18] sm:$0xff] %v702
        %711 = vst [vmem:[#allocation2 + $0x20] sm:$0xff] %v703
        %712 = vst [vmem:[#allocation2 + $0x28] sm:$0xff] %v704
        %713 = vst [vmem:[#allocation2 + $0x30] sm:$0xff] %v705
        %714 = vst [vmem:[#allocation2 + $0x38] sm:$0xff] %v706
        %p715 = scmp.eq.s32.totalorder %s28, 2
        // Predicated region
        $region49: #{tpu_custom_call.1} parent=31 // pred_check
          %p716 = pneg %p715
        $region50: #{tpu_custom_call.1} parent=31 // pred_check_branch
          %718 = sbr.rel (%p716) target = $region52
        $region51: #{tpu_custom_call.1} parent=31 // pred_region
          %v719 = vld [vmem:[#allocation2] sm:$0xff]
          %v720 = vld [vmem:[#allocation2 + $0x8] sm:$0xff]
          %v721 = vld [vmem:[#allocation2 + $0x10] sm:$0xff]
          %v722 = vld [vmem:[#allocation2 + $0x18] sm:$0xff]
          %v723 = vld [vmem:[#allocation2 + $0x20] sm:$0xff]
          %v724 = vld [vmem:[#allocation2 + $0x28] sm:$0xff]
          %v725 = vld [vmem:[#allocation2 + $0x30] sm:$0xff]
          %v726 = vld [vmem:[#allocation2 + $0x38] sm:$0xff]
          %727 = vst [vmem:[%s277] sm:$0xff] %v719
          %728 = vst [vmem:[%s277 + $0x8] sm:$0xff] %v720
          %729 = vst [vmem:[%s277 + $0x10] sm:$0xff] %v721
          %730 = vst [vmem:[%s277 + $0x18] sm:$0xff] %v722
          %731 = vst [vmem:[%s277 + $0x20] sm:$0xff] %v723
          %732 = vst [vmem:[%s277 + $0x28] sm:$0xff] %v724
          %733 = vst [vmem:[%s277 + $0x30] sm:$0xff] %v725
          %734 = vst [vmem:[%s277 + $0x38] sm:$0xff] %v726
        $region52: #{tpu_custom_call.1} parent=31 // pred_fallthru
          _
        %s735 = sand.u32 %s121, 1
        %s736 = scalar_lea.sflag [#allocation5], %s735
        %s737 = sand.u32 %s121, 1
        %s738 = smul.addr %s737, 64
        %s739 = scalar_lea.vmem [#allocation9], %s738
        // Predicated region
        $region53: #{tpu_custom_call.1} parent=31 // pred_check
          %p740 = pneg %p131
        $region54: #{tpu_custom_call.1} parent=31 // pred_check_branch
          %742 = sbr.rel (%p740) target = $region56
        $region55: #{tpu_custom_call.1} parent=31 // pred_region
          %s743 = smul.u32 8, %s27
          %s745 = ssub.s32 1024, 1024
          %746 = vsyncadd %s736, %s745
          %s747 = smul.addr %s743, 128
          %s748 = scalar_lea.hbm %s3, %s747
          %s749 = sshll.u32 %s739, 4
          %s750 = int_to_ptr.vmem [resolvable:$true] %s749
          %755 = dma.vmem_to_hbm [thread:$0]  %s750, 1024, %s748, %s736, 128, 128, 8
        $region56: #{tpu_custom_call.1} parent=31 // pred_fallthru
          _
      $region32: #{tpu_custom_call.1} parent=5 // pred_fallthru
        _
      %p756 = scmp.le.s32.totalorder 2, %s18
      // Predicated region
      $region57: #{tpu_custom_call.1} parent=5 // pred_check
        %p757 = pneg %p756
      $region58: #{tpu_custom_call.1} parent=5 // pred_check_branch
        %759 = sbr.rel (%p757) target = $region60
      $region59: #{tpu_custom_call.1} parent=5 // pred_region
        %s760 = ssub.s32 %s18, 2
        // Predicated region
        $region61: #{tpu_custom_call.1} parent=59 // pred_check
          %p761 = pneg %p137
        $region62: #{tpu_custom_call.1} parent=59 // pred_check_branch
          %763 = sbr.rel (%p761) target = $region64
        $region63: #{tpu_custom_call.1} parent=59 // pred_region
          %s764 = sand.u32 %s122, 1
          %s765 = scalar_lea.sflag [#allocation5], %s764
          %s766 = sand.u32 %s122, 1
          %s767 = smul.addr %s766, 64
          %s768 = scalar_lea.vmem [#allocation9], %s767
          %769 = dma.done %s765, 1024
        $region64: #{tpu_custom_call.1} parent=59 // pred_fallthru
          _
      $region60: #{tpu_custom_call.1} parent=5 // pred_fallthru
        _
    $region6: #{tpu_custom_call.1} parent=1 // loop_footer
      %s22 = sadd.s32 1, %s18
    $region7: #{tpu_custom_call.1} parent=1 // loop_footer_branch
      %17 = sbr.rel target = $region3
    $region8: #{tpu_custom_call.1} parent=1 // loop_exit
      _
    %770 = vsyncpa [#allocation4], 1
    %s771 = scalar_lea.sflag [#allocation4], 1
    %772 = vsyncpa %s771, 1
    %773 = vsyncpa [#allocation7], 1
    %s774 = scalar_lea.sflag [#allocation7], 1
    %775 = vsyncpa %s774, 1
    %776 = vsyncpa [#allocation5], 1
    %s777 = scalar_lea.sflag [#allocation5], 1
    %778 = vsyncpa %s777, 1

</llo_original>
